<compile_context>
chip_gen: v5e
topology: v5e:2x2
jax: 0.10.0
libtpu: 0.0.40
codegen_flags: <defaults>
</compile_context>

<pallas_src>
import math

import jax
import jax.numpy as jnp
from jax.experimental import pallas as pl
from jax.experimental.pallas import tpu as pltpu


_INV_SQRT2 = 0.7071067811865476


def _erf(z):
    # Abramowitz & Stegun 7.1.26 polynomial (max abs err ~1.5e-7).
    # The reciprocal is routed to the EUP (approx vrcp) to keep VALU slots free.
    a1, a2, a3, a4, a5 = 0.254829592, -0.284496736, 1.421413741, -1.453152027, 1.061405429
    p = 0.3275911
    az = jnp.abs(z)
    t = pl.reciprocal(1.0 + p * az, approx=True)
    poly = t * (a1 + t * (a2 + t * (a3 + t * (a4 + t * a5))))
    e = 1.0 - poly * jnp.exp(-az * az)
    return jnp.where(z < 0, -e, e)


def _gelu_exact(h):
    # Matches torch nn.GELU() (exact, erf-based) up to the approximations above.
    return 0.5 * h * (1.0 + _erf(h * _INV_SQRT2))


def _mlp_kernel(x_ref, w1_ref, b1_ref, w2_ref, b2_ref, o_ref, acc_ref):
    j = pl.program_id(1)

    @pl.when(j == 0)
    def _init():
        acc_ref[...] = jnp.zeros_like(acc_ref)

    # bf16 MXU matmuls, f32 accumulation.
    x = x_ref[...].astype(jnp.bfloat16)
    h = jnp.dot(x, w1_ref[...], preferred_element_type=jnp.float32)
    h = h + b1_ref[...]            # (1, tf) broadcast over sublanes, f32
    h = _gelu_exact(h)             # VPU/EUP, f32

    acc_ref[...] += jnp.dot(h.astype(jnp.bfloat16), w2_ref[...],
                            preferred_element_type=jnp.float32)

    @pl.when(j == pl.num_programs(1) - 1)
    def _finalize():
        o_ref[...] = (acc_ref[...] + b2_ref[...]).astype(o_ref.dtype)


def _round_up(x: int, m: int) -> int:
    return ((x + m - 1) // m) * m


def _plan_bytes(tm, tf, d_model_p, x_isz, out_isz):
    # Conservative VMEM footprint: double-buffered blocks + f32 accumulator
    # + an allowance (~4 live f32 temps + one bf16 copy) for the GELU chain.
    return (2 * tm * d_model_p * x_isz          # x blocks
            + 2 * d_model_p * tf * 2            # W1 blocks (bf16)
            + 2 * tf * d_model_p * 2            # W2 blocks (bf16)
            + 2 * tm * d_model_p * out_isz      # out blocks
            + 2 * (tf + d_model_p) * 4          # bias blocks (f32)
            + tm * d_model_p * 4                # f32 accumulator scratch
            + tm * tf * 18)                     # GELU intermediates


def mlp_block_forward(x: jax.Array, w1: jax.Array, b1: jax.Array,
                      w2: jax.Array, b2: jax.Array) -> jax.Array:
    """y = gelu(x @ w1 + b1) @ w2 + b2   (w1: (d_model, d_ff), w2: (d_ff, d_model))."""
    orig_shape = x.shape
    d_model = orig_shape[-1]
    d_ff = w1.shape[1]
    rows = math.prod(orig_shape[:-1]) if len(orig_shape) > 1 else 1
    out_dtype = x.dtype
    x_isz = jnp.dtype(x.dtype).itemsize
    out_isz = jnp.dtype(out_dtype).itemsize

    # Lane-dense padding (last dims -> multiples of 128).
    d_model_p = _round_up(d_model, 128)
    d_ff_p = _round_up(d_ff, 128)

    # ---- per-generation VMEM budget ----
    cap = 64 << 20
    try:
        info = pltpu.get_tpu_info()
        cap = int(getattr(info, "vmem_capacity_bytes", cap)) or cap
    except Exception:
        pass
    vmem_limit = max(32 << 20, min(int(cap * 0.8), 112 << 20))
    plan_budget = int(vmem_limit * 0.85)

    # ---- tile selection ----
    rows16 = _round_up(rows, 16)
    tm_cap = min(rows16, 2048)
    tm_cands = sorted({c for c in (2048, 1024, 512, 256, 128, 64, 32, 16, tm_cap)
                       if 16 <= c <= tm_cap}, reverse=True)

    def fits(tm_, tf_):
        return _plan_bytes(tm_, tf_, d_model_p, x_isz, out_isz) <= plan_budget

    def max_tm(tf_):
        for c in tm_cands:
            if fits(c, tf_):
                return c
        return None

    tm = tf = None
    # Prefer fully VMEM-resident weights (constant block index -> weights are
    # DMA'd from HBM exactly once) when that still allows a decent row tile.
    t = max_tm(d_ff_p)
    if t is not None and (t >= 256 or t >= rows16):
        tm, tf = t, d_ff_p
    if tm is None:
        # Stream weight slabs; maximize the row tile (arithmetic intensity vs
        # weight traffic = tm flops/byte), then the d_ff slab.
        best = None
        for cand in (1024, 512, 256, 128):
            if cand > d_ff_p or d_ff_p % cand:
                continue
            t = max_tm(cand)
            if t is None:
                continue
            if best is None or (t, cand) > best:
                best = (t, cand)
        if best is not None:
            tm, tf = best
    if tm is None:
        tm, tf = 16, 128   # last-resort minimal tiles

    # Keep >= 2 row tiles when possible so the "parallel" axis feeds both cores.
    if rows16 >= 32 and _round_up(rows, tm) // tm < 2:
        tm = max(16, _round_up((tm + 1) // 2, 16))

    rows_padded = _round_up(rows, tm)
    grid = (rows_padded // tm, d_ff_p // tf)

    # ---- operand preparation (zero padding is exact for this computation) ----
    x2d = x.reshape(rows, d_model)
    if rows_padded != rows or d_model_p != d_model:
        x2d = jnp.pad(x2d, ((0, rows_padded - rows), (0, d_model_p - d_model)))

    w1p = w1.astype(jnp.bfloat16)
    w2p = w2.astype(jnp.bfloat16)
    if d_model_p != d_model or d_ff_p != d_ff:
        w1p = jnp.pad(w1p, ((0, d_model_p - d_model), (0, d_ff_p - d_ff)))
        w2p = jnp.pad(w2p, ((0, d_ff_p - d_ff), (0, d_model_p - d_model)))

    b1p = b1.astype(jnp.float32)
    b2p = b2.astype(jnp.float32)
    if d_ff_p != d_ff:
        b1p = jnp.pad(b1p, (0, d_ff_p - d_ff))
    if d_model_p != d_model:
        b2p = jnp.pad(b2p, (0, d_model_p - d_model))
    b1_2d = b1p.reshape(1, d_ff_p)
    b2_2d = b2p.reshape(1, d_model_p)

    out = pl.pallas_call(
        _mlp_kernel,
        out_shape=jax.ShapeDtypeStruct((rows_padded, d_model_p), out_dtype),
        grid_spec=pltpu.PrefetchScalarGridSpec(
            num_scalar_prefetch=0,
            grid=grid,
            in_specs=[
                pl.BlockSpec((tm, d_model_p), lambda i, j: (i, 0)),   # x rows
                pl.BlockSpec((d_model_p, tf), lambda i, j: (0, j)),   # W1 column slab
                pl.BlockSpec((1, tf), lambda i, j: (0, j)),           # b1 slab
                pl.BlockSpec((tf, d_model_p), lambda i, j: (j, 0)),   # W2 row slab
                pl.BlockSpec((1, d_model_p), lambda i, j: (0, 0)),    # b2
            ],
            out_specs=pl.BlockSpec((tm, d_model_p), lambda i, j: (i, 0)),
            scratch_shapes=[pltpu.VMEM((tm, d_model_p), jnp.float32)],
        ),
        compiler_params=pltpu.CompilerParams(
            dimension_semantics=("parallel", "arbitrary"),
            vmem_limit_bytes=int(vmem_limit),
        ),
    )(x2d, w1p, b1_2d, w2p, b2_2d)

    if rows_padded != rows or d_model_p != d_model:
        out = out[:rows, :d_model]
    return out.reshape(orig_shape)


class MLPBlockPallas:
    """JAX/Pallas port of the torch MLPBlock (inference forward)."""

    def __init__(self, d_model: int, d_ff: int, stochdepth_rate: float, key):
        k1, k2, k3, k4 = jax.random.split(key, 4)
        bound1 = 1.0 / math.sqrt(d_model)
        bound2 = 1.0 / math.sqrt(d_ff)
        # Stored as (in, out), i.e. torch linear.weight.T, so the kernel does plain matmuls.
        self.w1 = jax.random.uniform(k1, (d_model, d_ff), jnp.float32, -bound1, bound1)
        self.b1 = jax.random.uniform(k2, (d_ff,), jnp.float32, -bound1, bound1)
        self.w2 = jax.random.uniform(k3, (d_ff, d_model), jnp.float32, -bound2, bound2)
        self.b2 = jax.random.uniform(k4, (d_model,), jnp.float32, -bound2, bound2)
        self.stochdepth_rate = stochdepth_rate

    def __call__(self, x: jax.Array) -> jax.Array:
        # TODO(synk): training-mode StochDepth (per-sample random drop, scale_by_keep)
        # is not applied; torch's forward is identity at inference, which is what we implement.
        return mlp_block_forward(x, self.w1, self.b1, self.w2, self.b2)


if __name__ == "__main__":
    key = jax.random.PRNGKey(0)
    kx, kp = jax.random.split(key)

    batch, seq, d_model, d_ff = 2, 8, 32, 128
    x = jax.random.normal(kx, (batch, seq, d_model), dtype=jnp.float32)

    mlp = MLPBlockPallas(d_model=d_model, d_ff=d_ff, stochdepth_rate=0.1, key=kp)
    y = mlp(x)
    jax.block_until_ready(y)

    # Reference with the same mixed-precision path (bf16 MXU inputs, f32 accumulate,
    # exact erf GELU, f32 biases); StochDepth is identity at inference.
    xb = x.reshape(-1, d_model).astype(jnp.bfloat16)
    w1b = mlp.w1.astype(jnp.bfloat16)
    w2b = mlp.w2.astype(jnp.bfloat16)
    h = jnp.dot(xb, w1b, preferred_element_type=jnp.float32) + mlp.b1
    h = 0.5 * h * (1.0 + jax.scipy.special.erf(h * jnp.float32(_INV_SQRT2)))
    ref = jnp.dot(h.astype(jnp.bfloat16), w2b, preferred_element_type=jnp.float32) + mlp.b2
    ref = ref.astype(x.dtype).reshape(x.shape)

    assert y.shape == x.shape
    err = float(jnp.max(jnp.abs(y - ref)))
    assert jnp.allclose(y, ref, atol=2e-2, rtol=2e-2), err
    print("KERNEL_OK")
</pallas_src>

<mosaic_0001>
module attributes {stable_mosaic.version = 11 : i64} {
  func.func @_mlp_kernel(%arg0: i32, %arg1: i32, %arg2: memref<16x128xf32, #tpu.memory_space<vmem>>, %arg3: memref<128x128xbf16, #tpu.memory_space<vmem>>, %arg4: memref<1x128xf32, #tpu.memory_space<vmem>>, %arg5: memref<128x128xbf16, #tpu.memory_space<vmem>>, %arg6: memref<1x128xf32, #tpu.memory_space<vmem>>, %arg7: memref<16x128xf32, #tpu.memory_space<vmem>>, %arg8: memref<16x128xf32, #tpu.memory_space<vmem>>) attributes {dimension_semantics = [#tpu.dimension_semantics<parallel>, #tpu.dimension_semantics<arbitrary>], iteration_bounds = array<i64: 1, 1>, scalar_prefetch = 0 : i64, scratch_operands = 1 : i64, tpu.core_type = #tpu.core_type<tc>, window_params = [{transform_indices = @transform_0, window_bounds = array<i64: 16, 128>}, {transform_indices = @transform_1, window_bounds = array<i64: 128, 128>}, {transform_indices = @transform_2, window_bounds = array<i64: 1, 128>}, {transform_indices = @transform_3, window_bounds = array<i64: 128, 128>}, {pipeline_mode = #tpu.pipeline_mode<synchronous>, transform_indices = @transform_4, window_bounds = array<i64: 1, 128>}, {transform_indices = @transform_5, window_bounds = array<i64: 16, 128>}]} {
    %c0_i32 = arith.constant 0 : i32
    %0 = arith.cmpi eq, %arg1, %c0_i32 : i32
    %1 = arith.extui %0 : i1 to i32
    %c0_i32_0 = arith.constant 0 : i32
    %2 = arith.cmpi ne, %1, %c0_i32_0 : i32
    scf.if %2 {
      %cst_29 = arith.constant 0.000000e+00 : f32
      %58 = vector.broadcast %cst_29 : f32 to vector<16x128xf32>
      %c0_30 = arith.constant 0 : index
      %c0_31 = arith.constant 0 : index
      %59 = vector.load %arg8[%c0_30, %c0_31] : memref<16x128xf32, #tpu.memory_space<vmem>>, vector<16x128xf32>
      tpu.vector_store %arg8[%c0_30, %c0_31], %58 {strides = array<i32>} : memref<16x128xf32, #tpu.memory_space<vmem>>, vector<16x128xf32>,
    } else {
    }
    %c0 = arith.constant 0 : index
    %c0_1 = arith.constant 0 : index
    %3 = vector.load %arg2[%c0, %c0_1] : memref<16x128xf32, #tpu.memory_space<vmem>>, vector<16x128xf32>
    %4 = arith.truncf %3 : vector<16x128xf32> to vector<16x128xbf16>
    %c0_2 = arith.constant 0 : index
    %c0_3 = arith.constant 0 : index
    %5 = vector.load %arg3[%c0_2, %c0_3] : memref<128x128xbf16, #tpu.memory_space<vmem>>, vector<128x128xbf16>
    %cst = arith.constant dense<0.000000e+00> : vector<16x128xf32>
    %6 = tpu.matmul %4, %5, %cst {dimension_numbers = #tpu.dot_dimension_numbers<[1], [0], [0], [1], [0, 0, 1, 1], [], []>} : vector<16x128xbf16>, vector<128x128xbf16>, vector<16x128xf32> -> vector<16x128xf32>
    %c0_4 = arith.constant 0 : index
    %c0_5 = arith.constant 0 : index
    %7 = vector.load %arg4[%c0_4, %c0_5] : memref<1x128xf32, #tpu.memory_space<vmem>>, vector<1x128xf32>
    %8 = vector.broadcast %7 : vector<1x128xf32> to vector<16x128xf32>
    %9 = arith.addf %6, %8 : vector<16x128xf32>
    %cst_6 = arith.constant 5.000000e-01 : f32
    %10 = vector.broadcast %cst_6 : f32 to vector<16x128xf32>
    %11 = arith.mulf %10, %9 : vector<16x128xf32>
    %cst_7 = arith.constant 0.707106769 : f32
    %12 = vector.broadcast %cst_7 : f32 to vector<16x128xf32>
    %13 = arith.mulf %9, %12 : vector<16x128xf32>
    %14 = math.absf %13 : vector<16x128xf32>
    %cst_8 = arith.constant 0.327591091 : f32
    %15 = vector.broadcast %cst_8 : f32 to vector<16x128xf32>
    %16 = arith.mulf %15, %14 : vector<16x128xf32>
    %cst_9 = arith.constant 1.000000e+00 : f32
    %17 = vector.broadcast %cst_9 : f32 to vector<16x128xf32>
    %18 = arith.addf %17, %16 : vector<16x128xf32>
    %19 = tpu.reciprocal %18 {approx = true} : vector<16x128xf32> -> vector<16x128xf32>
    %cst_10 = arith.constant 1.06140542 : f32
    %20 = vector.broadcast %cst_10 : f32 to vector<16x128xf32>
    %21 = arith.mulf %19, %20 : vector<16x128xf32>
    %cst_11 = arith.constant -1.45315206 : f32
    %22 = vector.broadcast %cst_11 : f32 to vector<16x128xf32>
    %23 = arith.addf %22, %21 : vector<16x128xf32>
    %24 = arith.mulf %19, %23 : vector<16x128xf32>
    %cst_12 = arith.constant 1.42141378 : f32
    %25 = vector.broadcast %cst_12 : f32 to vector<16x128xf32>
    %26 = arith.addf %25, %24 : vector<16x128xf32>
    %27 = arith.mulf %19, %26 : vector<16x128xf32>
    %cst_13 = arith.constant -0.284496725 : f32
    %28 = vector.broadcast %cst_13 : f32 to vector<16x128xf32>
    %29 = arith.addf %28, %27 : vector<16x128xf32>
    %30 = arith.mulf %19, %29 : vector<16x128xf32>
    %cst_14 = arith.constant 0.254829586 : f32
    %31 = vector.broadcast %cst_14 : f32 to vector<16x128xf32>
    %32 = arith.addf %31, %30 : vector<16x128xf32>
    %33 = arith.mulf %19, %32 : vector<16x128xf32>
    %cst_15 = arith.constant 0.000000e+00 : f32
    %34 = vector.broadcast %cst_15 : f32 to vector<16x128xf32>
    %35 = arith.subf %34, %14 : vector<16x128xf32>
    %36 = arith.mulf %35, %14 : vector<16x128xf32>
    %37 = math.exp %36 : vector<16x128xf32>
    %38 = arith.mulf %33, %37 : vector<16x128xf32>
    %cst_16 = arith.constant 1.000000e+00 : f32
    %39 = vector.broadcast %cst_16 : f32 to vector<16x128xf32>
    %40 = arith.subf %39, %38 : vector<16x128xf32>
    %cst_17 = arith.constant 0.000000e+00 : f32
    %41 = vector.broadcast %cst_17 : f32 to vector<16x128xf32>
    %42 = arith.cmpf olt, %13, %41 : vector<16x128xf32>
    %cst_18 = arith.constant 0.000000e+00 : f32
    %43 = vector.broadcast %cst_18 : f32 to vector<16x128xf32>
    %44 = arith.subf %43, %40 : vector<16x128xf32>
    %45 = arith.select %42, %44, %40 : vector<16x128xi1>, vector<16x128xf32>
    %cst_19 = arith.constant 1.000000e+00 : f32
    %46 = vector.broadcast %cst_19 : f32 to vector<16x128xf32>
    %47 = arith.addf %46, %45 : vector<16x128xf32>
    %48 = arith.mulf %11, %47 : vector<16x128xf32>
    %c0_20 = arith.constant 0 : index
    %c0_21 = arith.constant 0 : index
    %49 = vector.load %arg8[%c0_20, %c0_21] : memref<16x128xf32, #tpu.memory_space<vmem>>, vector<16x128xf32>
    %50 = arith.truncf %48 : vector<16x128xf32> to vector<16x128xbf16>
    %c0_22 = arith.constant 0 : index
    %c0_23 = arith.constant 0 : index
    %51 = vector.load %arg5[%c0_22, %c0_23] : memref<128x128xbf16, #tpu.memory_space<vmem>>, vector<128x128xbf16>
    %cst_24 = arith.constant dense<0.000000e+00> : vector<16x128xf32>
    %52 = tpu.matmul %50, %51, %cst_24 {dimension_numbers = #tpu.dot_dimension_numbers<[1], [0], [0], [1], [0, 0, 1, 1], [], []>} : vector<16x128xbf16>, vector<128x128xbf16>, vector<16x128xf32> -> vector<16x128xf32>
    %53 = arith.addf %49, %52 : vector<16x128xf32>
    %c0_25 = arith.constant 0 : index
    %c0_26 = arith.constant 0 : index
    %54 = vector.load %arg8[%c0_25, %c0_26] : memref<16x128xf32, #tpu.memory_space<vmem>>, vector<16x128xf32>
    tpu.vector_store %arg8[%c0_25, %c0_26], %53 {strides = array<i32>} : memref<16x128xf32, #tpu.memory_space<vmem>>, vector<16x128xf32>,
    %c0_i32_27 = arith.constant 0 : i32
    %55 = arith.cmpi eq, %arg1, %c0_i32_27 : i32
    %56 = arith.extui %55 : i1 to i32
    %c0_i32_28 = arith.constant 0 : i32
    %57 = arith.cmpi ne, %56, %c0_i32_28 : i32
    scf.if %57 {
      %c0_29 = arith.constant 0 : index
      %c0_30 = arith.constant 0 : index
      %58 = vector.load %arg8[%c0_29, %c0_30] : memref<16x128xf32, #tpu.memory_space<vmem>>, vector<16x128xf32>
      %c0_31 = arith.constant 0 : index
      %c0_32 = arith.constant 0 : index
      %59 = vector.load %arg6[%c0_31, %c0_32] : memref<1x128xf32, #tpu.memory_space<vmem>>, vector<1x128xf32>
      %60 = vector.broadcast %59 : vector<1x128xf32> to vector<16x128xf32>
      %61 = arith.addf %58, %60 : vector<16x128xf32>
      %c0_33 = arith.constant 0 : index
      %c0_34 = arith.constant 0 : index
      %62 = vector.load %arg7[%c0_33, %c0_34] : memref<16x128xf32, #tpu.memory_space<vmem>>, vector<16x128xf32>
      tpu.vector_store %arg7[%c0_33, %c0_34], %61 {strides = array<i32>} : memref<16x128xf32, #tpu.memory_space<vmem>>, vector<16x128xf32>,
    } else {
    }
    return
  }
  func.func @transform_0(%arg0: i32, %arg1: i32) -> (i32, i32) {
    %c0_i32 = arith.constant 0 : i32
    %c0_i32_0 = arith.constant 0 : i32
    return %arg0, %c0_i32 : i32, i32
  }
  func.func @transform_1(%arg0: i32, %arg1: i32) -> (i32, i32) {
    %c0_i32 = arith.constant 0 : i32
    %c0_i32_0 = arith.constant 0 : i32
    return %c0_i32, %arg1 : i32, i32
  }
  func.func @transform_2(%arg0: i32, %arg1: i32) -> (i32, i32) {
    %c0_i32 = arith.constant 0 : i32
    %c0_i32_0 = arith.constant 0 : i32
    return %c0_i32, %arg1 : i32, i32
  }
  func.func @transform_3(%arg0: i32, %arg1: i32) -> (i32, i32) {
    %c0_i32 = arith.constant 0 : i32
    %c0_i32_0 = arith.constant 0 : i32
    return %arg1, %c0_i32 : i32, i32
  }
  func.func @transform_4(%arg0: i32, %arg1: i32) -> (i32, i32) {
    %c0_i32 = arith.constant 0 : i32
    %c0_i32_0 = arith.constant 0 : i32
    %c0_i32_1 = arith.constant 0 : i32
    return %c0_i32, %c0_i32_0 : i32, i32
  }
  func.func @transform_5(%arg0: i32, %arg1: i32) -> (i32, i32) {
    %c0_i32 = arith.constant 0 : i32
    %c0_i32_0 = arith.constant 0 : i32
    return %arg0, %c0_i32 : i32, i32
  }
}

</mosaic_0001>

<llo_original>
// kernel: tpu_custom_call.1
$region0: #{tpu_custom_call.1}
  #allocation0 [shape = 'u32[]', space=smem, size = 0x4, offset = 0x4, fixed_abs, tag = 'smem constant byte address 0x4 - core index']
  #allocation1 [shape = 'u32[72,128]{1,0:T(1,128)}', space=vmem, size = 0x9000, scoped, tag = 'internal scratch']
  #allocation2 [shape = 'f32[16,128]{1,0:T(8,128)}', space=vmem, size = 0x2000, scoped, tag = 'scratch operand']
  %s0 = inlined_call_operand.hbm [shape: f32[16,128], index: 0, kind: input, shape index: {}]
  %s1 = inlined_call_operand.hbm [shape: bf16[128,128], index: 1, kind: input, shape index: {}]
  %s2 = inlined_call_operand.vmem [shape: f32[1,128], index: 2, kind: input, shape index: {}]
  %s3 = inlined_call_operand.hbm [shape: bf16[128,128], index: 3, kind: input, shape index: {}]
  %s4 = inlined_call_operand.vmem [shape: f32[1,128], index: 4, kind: input, shape index: {}]
  %s5 = inlined_call_operand.hbm [shape: f32[16,128], index: 5, kind: output, shape index: {}]
  %s6 = sld [smem:[#allocation0]]
  $region50: #{tpu_custom_call.1} parent=0
    _
  %s8 = ssub.s32 1, %s6
  %s9 = scalar_select 0, %s8, %s6
  $region1: #{tpu_custom_call.1} parent=0
    #allocation3 [shape = 'u8[8192]{0}', space=vmem, size = 0x2000, scoped, tag = 'input window, operand 0, single buffered']
    #allocation4 [shape = 's32[1]{0}', space=sflag, size = 0x4, scoped, tag = 'scoped memory for tpu_custom_call.1']
    #allocation5 [shape = 's32[1]{0}', space=sflag, size = 0x4, scoped, tag = 'scoped memory for tpu_custom_call.1']
    #allocation6 [shape = 'u8[32768]{0}', space=vmem, size = 0x8000, scoped, tag = 'input window, operand 1, single buffered']
    #allocation7 [shape = 's32[1]{0}', space=sflag, size = 0x4, scoped, tag = 'scoped memory for tpu_custom_call.1']
    #allocation8 [shape = 'u8[32768]{0}', space=vmem, size = 0x8000, scoped, tag = 'input window, operand 3, single buffered']
    #allocation9 [shape = 'u8[8192]{0}', space=vmem, size = 0x2000, scoped, tag = 'output window, operand 0, single buffered']
    %10 = vsyncpa [#allocation4], 0
    %11 = vsyncpa [#allocation7], 0
    %12 = vsyncpa [#allocation5], 0
    // Predicated region
    $region2: #{tpu_custom_call.1} parent=1 // pred_check
      _
    $region3: #{tpu_custom_call.1} parent=1 // pred_check_branch
      %14 = sbr.rel (0) target = $region5
    $region4: #{tpu_custom_call.1} parent=1 // pred_region
      %16 = vsyncadd [#allocation4], 0
      %s17 = sshll.u32 %s0, 4
      %s18 = int_to_ptr.hbm [resolvable:$true] %s17
      %s19 = sshll.u32 [#allocation3], 4
      %s20 = int_to_ptr.vmem [resolvable:$true] %s19
      %25 = dma.hbm_to_vmem [thread:$0]  %s18, 256, %s20, [#allocation4], 128, 128, 8
    $region5: #{tpu_custom_call.1} parent=1 // pred_fallthru
      _
    // Predicated region
    $region6: #{tpu_custom_call.1} parent=1 // pred_check
      _
    $region7: #{tpu_custom_call.1} parent=1 // pred_check_branch
      %27 = sbr.rel (0) target = $region9
    $region8: #{tpu_custom_call.1} parent=1 // pred_region
      %29 = vsyncadd [#allocation7], 0
      %s30 = sshll.u32 %s1, 4
      %s31 = int_to_ptr.hbm [resolvable:$true] %s30
      %s32 = sshll.u32 [#allocation6], 4
      %s33 = int_to_ptr.vmem [resolvable:$true] %s32
      %38 = dma.hbm_to_vmem [thread:$0]  %s31, 1024, %s33, [#allocation7], 64, 64, 4
    $region9: #{tpu_custom_call.1} parent=1 // pred_fallthru
      _
    // Predicated region
    $region10: #{tpu_custom_call.1} parent=1 // pred_check
      _
    $region11: #{tpu_custom_call.1} parent=1 // pred_check_branch
      %40 = sbr.rel (0) target = $region13
    $region12: #{tpu_custom_call.1} parent=1 // pred_region
      _
    $region13: #{tpu_custom_call.1} parent=1 // pred_fallthru
      _
    // Predicated region
    $region14: #{tpu_custom_call.1} parent=1 // pred_check
      _
    $region15: #{tpu_custom_call.1} parent=1 // pred_check_branch
      %42 = sbr.rel (0) target = $region17
    $region16: #{tpu_custom_call.1} parent=1 // pred_region
      %44 = vsyncadd [#allocation7], 0
      %s45 = sshll.u32 %s3, 4
      %s46 = int_to_ptr.hbm [resolvable:$true] %s45
      %s47 = sshll.u32 [#allocation8], 4
      %s48 = int_to_ptr.vmem [resolvable:$true] %s47
      %53 = dma.hbm_to_vmem [thread:$0]  %s46, 1024, %s48, [#allocation7], 64, 64, 4
    $region17: #{tpu_custom_call.1} parent=1 // pred_fallthru
      _
    // Predicated region
    $region18: #{tpu_custom_call.1} parent=1 // pred_check
      _
    $region19: #{tpu_custom_call.1} parent=1 // pred_check_branch
      %55 = sbr.rel (0) target = $region21
    $region20: #{tpu_custom_call.1} parent=1 // pred_region
      _
    $region21: #{tpu_custom_call.1} parent=1 // pred_fallthru
      _
    // Predicated region
    $region22: #{tpu_custom_call.1} parent=1 // pred_check
      _
    $region23: #{tpu_custom_call.1} parent=1 // pred_check_branch
      %57 = sbr.rel (0) target = $region25
    $region24: #{tpu_custom_call.1} parent=1 // pred_region
      %59 = dma.done [#allocation4], 256
    $region25: #{tpu_custom_call.1} parent=1 // pred_fallthru
      _
    // Predicated region
    $region26: #{tpu_custom_call.1} parent=1 // pred_check
      _
    $region27: #{tpu_custom_call.1} parent=1 // pred_check_branch
      %61 = sbr.rel (0) target = $region29
    $region28: #{tpu_custom_call.1} parent=1 // pred_region
      %63 = dma.done [#allocation7], 1024
    $region29: #{tpu_custom_call.1} parent=1 // pred_fallthru
      _
    // Predicated region
    $region30: #{tpu_custom_call.1} parent=1 // pred_check
      _
    $region31: #{tpu_custom_call.1} parent=1 // pred_check_branch
      %65 = sbr.rel (0) target = $region33
    $region32: #{tpu_custom_call.1} parent=1 // pred_region
      %67 = dma.done [#allocation7], 1024
    $region33: #{tpu_custom_call.1} parent=1 // pred_fallthru
      _
    %p68 = scmp.eq.s32.totalorder 0, 0
    // Predicated region
    $region34: #{tpu_custom_call.1} parent=1 // pred_check
      %p69 = pneg %p68
    $region35: #{tpu_custom_call.1} parent=1 // pred_check_branch
      %71 = sbr.rel (%p69) target = $region37
    $region36: #{tpu_custom_call.1} parent=1 // pred_region
      %72 = vst [vmem:[#allocation2] sm:$0xff] 0.0
      %73 = vst [vmem:[#allocation2 + $0x8] sm:$0xff] 0.0
    $region37: #{tpu_custom_call.1} parent=1 // pred_fallthru
      _
    %v74 = vld [vmem:[#allocation3] sm:$0xff]
    %v75 = vld [vmem:[#allocation3 + $0x8] sm:$0xff]
    %v76 = vpack.c.bf16 %v75, %v74
    %v77 = vld [vmem:[#allocation6] sm:$0xf]
    %v78 = vld [vmem:[#allocation6 + $0x4] sm:$0xf]
    %v79 = vld [vmem:[#allocation6 + $0x8] sm:$0xf]
    %v80 = vld [vmem:[#allocation6 + $0xc] sm:$0xf]
    %v81 = vld [vmem:[#allocation6 + $0x10] sm:$0xf]
    %v82 = vld [vmem:[#allocation6 + $0x14] sm:$0xf]
    %v83 = vld [vmem:[#allocation6 + $0x18] sm:$0xf]
    %v84 = vld [vmem:[#allocation6 + $0x1c] sm:$0xf]
    %v85 = vld [vmem:[#allocation6 + $0x20] sm:$0xf]
    %v86 = vld [vmem:[#allocation6 + $0x24] sm:$0xf]
    %v87 = vld [vmem:[#allocation6 + $0x28] sm:$0xf]
    %v88 = vld [vmem:[#allocation6 + $0x2c] sm:$0xf]
    %v89 = vld [vmem:[#allocation6 + $0x30] sm:$0xf]
    %v90 = vld [vmem:[#allocation6 + $0x34] sm:$0xf]
    %v91 = vld [vmem:[#allocation6 + $0x38] sm:$0xf]
    %v92 = vld [vmem:[#allocation6 + $0x3c] sm:$0xf]
    %v93 = vld [vmem:[%s2] sm:$0x1]
    %v95 = vperm.slane %v93, 0
    %v113 = vunpack.c.l.b16 %v77
    %v114 = vunpack.c.l.b16 %v78
    %v115 = vunpack.c.l.b16 %v79
    %v116 = vunpack.c.l.b16 %v80
    %v117 = vunpack.c.l.b16 %v81
    %v118 = vunpack.c.l.b16 %v82
    %v119 = vunpack.c.l.b16 %v83
    %v120 = vunpack.c.l.b16 %v84
    %v121 = vunpack.c.l.b16 %v85
    %v122 = vunpack.c.l.b16 %v86
    %v123 = vunpack.c.l.b16 %v87
    %v124 = vunpack.c.l.b16 %v88
    %v125 = vunpack.c.l.b16 %v89
    %v126 = vunpack.c.l.b16 %v90
    %v127 = vunpack.c.l.b16 %v91
    %v128 = vunpack.c.l.b16 %v92
    %v129 = vpack.c.b16 %v114, %v113
    %v130 = vpack.c.b16 %v116, %v115
    %v131 = vpack.c.b16 %v118, %v117
    %v132 = vpack.c.b16 %v120, %v119
    %v133 = vpack.c.b16 %v122, %v121
    %v134 = vpack.c.b16 %v124, %v123
    %v135 = vpack.c.b16 %v126, %v125
    %v136 = vpack.c.b16 %v128, %v127
    %145 = vmatpush.bf16.msra.mxu0 %v136
    %146 = vmatpush.bf16.msra.mxu0 %v135
    %147 = vmatpush.bf16.msra.mxu0 %v134
    %148 = vmatpush.bf16.msra.mxu0 %v133
    %149 = vmatpush.bf16.msra.mxu0 %v132
    %150 = vmatpush.bf16.msra.mxu0 %v131
    %151 = vmatpush.bf16.msra.mxu0 %v130
    %152 = vmatpush.bf16.msra.mxu0 %v129
    %153 = vmatmul.bf16.gmra.mxu0 %v76
    %v154 = vpop.f32.mrf.mxu0
    %v155 = vadd.f32 %v95, %v154
    %v156 = vpop.f32.mrf.mxu0
    %v157 = vadd.f32 %v95, %v156
    %158 = vdwg.mxu0
    %v159 = vmul.f32 %v155, 0.5
    %v160 = vmul.f32 %v157, 0.5
    %v161 = vmul.f32 %v155, 0.70710677
    %v162 = vmul.f32 %v157, 0.70710677
    %v163 = vand.u32 2147483647, %v161
    %v164 = vand.u32 2147483647, %v162
    %v165 = vmul.f32 %v163, 0.3275911
    %v166 = vmul.f32 %v164, 0.3275911
    %v167 = vadd.f32 %v165, 1.0
    %v168 = vadd.f32 %v166, 1.0
    %v169 = vrcp.pop %v167
    %v170 = vrcp.pop %v168
    %v171 = vmul.f32 %v169, 1.0614054
    %v172 = vmul.f32 %v170, 1.0614054
    %v173 = vadd.f32 %v171, -1.4531521
    %v174 = vadd.f32 %v172, -1.4531521
    %v175 = vmul.f32 %v169, %v173
    %v176 = vmul.f32 %v170, %v174
    %v177 = vadd.f32 %v175, 1.4214138
    %v178 = vadd.f32 %v176, 1.4214138
    %v179 = vmul.f32 %v169, %v177
    %v180 = vmul.f32 %v170, %v178
    %v181 = vadd.f32 %v179, -0.28449672
    %v182 = vadd.f32 %v180, -0.28449672
    %v183 = vmul.f32 %v169, %v181
    %v184 = vmul.f32 %v170, %v182
    %v185 = vadd.f32 %v183, 0.2548296
    %v186 = vadd.f32 %v184, 0.2548296
    %v187 = vmul.f32 %v169, %v185
    %v188 = vmul.f32 %v170, %v186
    %v189 = vsub.f32 0.0, %v163
    %v190 = vsub.f32 0.0, %v164
    %v191 = vmul.f32 %v189, %v163
    %v192 = vmul.f32 %v190, %v164
    %v193 = vmul.f32 %v191, 1.442695
    %v194 = vpow.pop %v193
    %v195 = vmul.f32 %v192, 1.442695
    %v196 = vpow.pop %v195
    %v197 = vmul.f32 %v187, %v194
    %v198 = vmul.f32 %v188, %v196
    %v199 = vsub.f32 1.0, %v197
    %v200 = vsub.f32 1.0, %v198
    %vm201 = vcmp.lt.f32.partialorder %v161, 0.0
    %vm202 = vcmp.lt.f32.partialorder %v162, 0.0
    %v203 = vsub.f32 0.0, %v199
    %v204 = vsub.f32 0.0, %v200
    %v205 = vsel %vm201, %v203, %v199
    %v206 = vsel %vm202, %v204, %v200
    %v207 = vadd.f32 %v205, 1.0
    %v208 = vadd.f32 %v206, 1.0
    %v209 = vmul.f32 %v159, %v207
    %v210 = vmul.f32 %v160, %v208
    %v211 = vld [vmem:[#allocation2] sm:$0xff]
    %v212 = vld [vmem:[#allocation2 + $0x8] sm:$0xff]
    %v213 = vpack.c.bf16 %v210, %v209
    %v214 = vld [vmem:[#allocation8] sm:$0xf]
    %v215 = vld [vmem:[#allocation8 + $0x4] sm:$0xf]
    %v216 = vld [vmem:[#allocation8 + $0x8] sm:$0xf]
    %v217 = vld [vmem:[#allocation8 + $0xc] sm:$0xf]
    %v218 = vld [vmem:[#allocation8 + $0x10] sm:$0xf]
    %v219 = vld [vmem:[#allocation8 + $0x14] sm:$0xf]
    %v220 = vld [vmem:[#allocation8 + $0x18] sm:$0xf]
    %v221 = vld [vmem:[#allocation8 + $0x1c] sm:$0xf]
    %v222 = vld [vmem:[#allocation8 + $0x20] sm:$0xf]
    %v223 = vld [vmem:[#allocation8 + $0x24] sm:$0xf]
    %v224 = vld [vmem:[#allocation8 + $0x28] sm:$0xf]
    %v225 = vld [vmem:[#allocation8 + $0x2c] sm:$0xf]
    %v226 = vld [vmem:[#allocation8 + $0x30] sm:$0xf]
    %v227 = vld [vmem:[#allocation8 + $0x34] sm:$0xf]
    %v228 = vld [vmem:[#allocation8 + $0x38] sm:$0xf]
    %v229 = vld [vmem:[#allocation8 + $0x3c] sm:$0xf]
    %v246 = vunpack.c.l.b16 %v214
    %v247 = vunpack.c.l.b16 %v215
    %v248 = vunpack.c.l.b16 %v216
    %v249 = vunpack.c.l.b16 %v217
    %v250 = vunpack.c.l.b16 %v218
    %v251 = vunpack.c.l.b16 %v219
    %v252 = vunpack.c.l.b16 %v220
    %v253 = vunpack.c.l.b16 %v221
    %v254 = vunpack.c.l.b16 %v222
    %v255 = vunpack.c.l.b16 %v223
    %v256 = vunpack.c.l.b16 %v224
    %v257 = vunpack.c.l.b16 %v225
    %v258 = vunpack.c.l.b16 %v226
    %v259 = vunpack.c.l.b16 %v227
    %v260 = vunpack.c.l.b16 %v228
    %v261 = vunpack.c.l.b16 %v229
    %v262 = vpack.c.b16 %v247, %v246
    %v263 = vpack.c.b16 %v249, %v248
    %v264 = vpack.c.b16 %v251, %v250
    %v265 = vpack.c.b16 %v253, %v252
    %v266 = vpack.c.b16 %v255, %v254
    %v267 = vpack.c.b16 %v257, %v256
    %v268 = vpack.c.b16 %v259, %v258
    %v269 = vpack.c.b16 %v261, %v260
    %278 = vmatpush.bf16.msra.mxu0 %v269
    %279 = vmatpush.bf16.msra.mxu0 %v268
    %280 = vmatpush.bf16.msra.mxu0 %v267
    %281 = vmatpush.bf16.msra.mxu0 %v266
    %282 = vmatpush.bf16.msra.mxu0 %v265
    %283 = vmatpush.bf16.msra.mxu0 %v264
    %284 = vmatpush.bf16.msra.mxu0 %v263
    %285 = vmatpush.bf16.msra.mxu0 %v262
    %286 = vmatmul.bf16.gmra.mxu0 %v213
    %v287 = vpop.f32.mrf.mxu0
    %v288 = vadd.f32 0.0, %v287
    %v289 = vpop.f32.mrf.mxu0
    %v290 = vadd.f32 0.0, %v289
    %291 = vdwg.mxu0
    %v292 = vadd.f32 %v211, %v288
    %v293 = vadd.f32 %v212, %v290
    %294 = vst [vmem:[#allocation2] sm:$0xff] %v292
    %295 = vst [vmem:[#allocation2 + $0x8] sm:$0xff] %v293
    // Predicated region
    $region38: #{tpu_custom_call.1} parent=1 // pred_check
      %p296 = pneg %p68
    $region39: #{tpu_custom_call.1} parent=1 // pred_check_branch
      %298 = sbr.rel (%p296) target = $region41
    $region40: #{tpu_custom_call.1} parent=1 // pred_region
      %v299 = vld [vmem:[#allocation2] sm:$0xff]
      %v300 = vld [vmem:[#allocation2 + $0x8] sm:$0xff]
      %v301 = vld [vmem:[%s4] sm:$0x1]
      %v303 = vperm.slane %v301, 0
      %v305 = vadd.f32 %v299, %v303
      %v306 = vadd.f32 %v300, %v303
      %307 = vst [vmem:[#allocation9] sm:$0xff] %v305
      %308 = vst [vmem:[#allocation9 + $0x8] sm:$0xff] %v306
    $region41: #{tpu_custom_call.1} parent=1 // pred_fallthru
      _
    // Predicated region
    $region42: #{tpu_custom_call.1} parent=1 // pred_check
      _
    $region43: #{tpu_custom_call.1} parent=1 // pred_check_branch
      %310 = sbr.rel (0) target = $region45
    $region44: #{tpu_custom_call.1} parent=1 // pred_region
      %312 = vsyncadd [#allocation5], 0
      %s313 = sshll.u32 [#allocation9], 4
      %s314 = int_to_ptr.vmem [resolvable:$true] %s313
      %s315 = sshll.u32 %s5, 4
      %s316 = int_to_ptr.hbm [resolvable:$true] %s315
      %321 = dma.vmem_to_hbm [thread:$0]  %s314, 256, %s316, [#allocation5], 128, 128, 8
    $region45: #{tpu_custom_call.1} parent=1 // pred_fallthru
      _
    // Predicated region
    $region46: #{tpu_custom_call.1} parent=1 // pred_check
      _
    $region47: #{tpu_custom_call.1} parent=1 // pred_check_branch
      %323 = sbr.rel (0) target = $region49
    $region48: #{tpu_custom_call.1} parent=1 // pred_region
      %325 = dma.done [#allocation5], 256
    $region49: #{tpu_custom_call.1} parent=1 // pred_fallthru
      _
    %326 = vsyncpa [#allocation4], 1
    %327 = vsyncpa [#allocation7], 1
    %328 = vsyncpa [#allocation5], 1

</llo_original>
